<compile_context>
chip_gen: v7x
topology: tpu7x:2x2x1
jax: 0.10.0
libtpu: 0.0.40
codegen_flags: <defaults>
</compile_context>

<pallas_src>
import functools

import jax
import jax.numpy as jnp
from jax.experimental import pallas as pl
from jax.experimental.pallas import tpu as pltpu


def _t2v_cos_kernel(tau_ref, w_ref, b_ref, o_ref, *, last_col):
    # One fused step per (N-tile, F-tile): MXU matmul (f32 accumulate),
    # VPU bias add, EUP cosine, dense store.
    z = jnp.dot(tau_ref[...], w_ref[...], preferred_element_type=jnp.float32)
    z = z + b_ref[...]

    # Dense, unmasked store of cos over the whole tile.
    o_ref[...] = jnp.cos(z).astype(o_ref.dtype)

    # The single linear (identity) column is the globally-last output column;
    # it lives only in the last F tile.  Overwrite just that one column there.
    # (cos was computed for it too — harmless, no NaN risk — then replaced.)
    @pl.when(pl.program_id(1) == pl.num_programs(1) - 1)
    def _():
        o_ref[:, last_col:last_col + 1] = (
            z[:, last_col:last_col + 1].astype(o_ref.dtype))


def _pick_tile_f(out_features: int) -> int:
    # Lane-dense F tiling only when out_features is a large multiple of 128;
    # otherwise the full width is the only legal (and cheapest) block.
    if out_features > 512 and out_features % 128 == 0:
        for cand in (512, 256, 128):
            if out_features % cand == 0:
                return cand
    return out_features


def cosine_activation_fused(tau, w_full, b_full, *, tile_n_max: int = 1024):
    """Forward pass given pre-fused parameters.

    tau:    (N, in_features)
    w_full: (in_features, out_features)  -- [w | w0], periodic cols first
    b_full: (1, out_features)            -- [b | b0]
    """
    n, in_features = tau.shape
    out_features = w_full.shape[1]

    tile_f = _pick_tile_f(out_features)
    tile_n = n if n <= tile_n_max else tile_n_max

    grid = (pl.cdiv(n, tile_n), pl.cdiv(out_features, tile_f))

    kernel = functools.partial(_t2v_cos_kernel, last_col=tile_f - 1)

    # VMEM budget: double-buffered tau/out tiles + resident weight/bias tiles,
    # with headroom.  Capped well below v7x's 64 MiB physical VMEM.
    itemsize = jnp.dtype(tau.dtype).itemsize
    tile_bytes = itemsize * (tile_n * in_features + tile_n * tile_f)
    resident_bytes = itemsize * (in_features * tile_f + tile_f)
    vmem_limit = min(max(4 * (tile_bytes + resident_bytes), 16 * 1024 * 1024),
                     48 * 1024 * 1024)

    cost = pl.CostEstimate(
        flops=2 * n * in_features * out_features,
        transcendentals=n * (out_features - 1),
        bytes_accessed=itemsize * (n * in_features
                                   + in_features * out_features
                                   + out_features
                                   + n * out_features),
    )

    return pl.pallas_call(
        kernel,
        out_shape=jax.ShapeDtypeStruct((n, out_features), tau.dtype),
        grid_spec=pltpu.PrefetchScalarGridSpec(
            num_scalar_prefetch=0,
            grid=grid,
            in_specs=[
                pl.BlockSpec((tile_n, in_features), lambda i, j: (i, 0)),
                pl.BlockSpec((in_features, tile_f), lambda i, j: (0, j)),
                pl.BlockSpec((1, tile_f), lambda i, j: (0, j)),
            ],
            out_specs=pl.BlockSpec((tile_n, tile_f), lambda i, j: (i, j)),
        ),
        compiler_params=pltpu.CompilerParams(
            dimension_semantics=("parallel", "parallel"),
            vmem_limit_bytes=vmem_limit,
        ),
        cost_estimate=cost,
    )(tau, w_full, b_full)


def make_cosine_activation(w, b, w0, b0, *, tile_n_max: int = 1024):
    """Fuse parameters ONCE (init time) and return the forward callable.

    w:  (in_features, out_features - 1)   b:  (out_features - 1,)
    w0: (in_features, 1)                  b0: (1,)
    Column order matches torch.cat([v1, v2], 1): periodic first, linear last.
    """
    w_full = jnp.concatenate([w, w0], axis=1)                 # (in, out)
    b_full = jnp.concatenate([b, b0], axis=0).reshape(1, -1)  # (1, out)

    def forward(tau):
        return cosine_activation_fused(tau, w_full, b_full,
                                       tile_n_max=tile_n_max)

    return forward


def cosine_activation(tau, w, b, w0, b0):
    """Convenience one-shot wrapper (fuses weights per call; prefer
    make_cosine_activation in a real model so fusion happens once)."""
    return make_cosine_activation(w, b, w0, b0)(tau)


if __name__ == "__main__":
    # Deterministic synthetic parameters (mirrors torch.randn init shapes).
    in_features = 16
    out_features = 32
    batch = 8

    key = jax.random.PRNGKey(0)
    k_tau, k_w0, k_b0, k_w, k_b, k_tau2 = jax.random.split(key, 6)

    tau = jax.random.normal(k_tau, (batch, in_features), dtype=jnp.float32)
    w0 = jax.random.normal(k_w0, (in_features, 1), dtype=jnp.float32)
    b0 = jax.random.normal(k_b0, (1,), dtype=jnp.float32)
    w = jax.random.normal(k_w, (in_features, out_features - 1), dtype=jnp.float32)
    b = jax.random.normal(k_b, (out_features - 1,), dtype=jnp.float32)

    def ref_fn(t):
        v1 = jnp.cos(t @ w + b)
        v2 = t @ w0 + b0
        return jnp.concatenate([v1, v2], axis=1)

    # Fuse weights once, jit the forward.
    forward = jax.jit(make_cosine_activation(w, b, w0, b0))
    out = jax.block_until_ready(forward(tau))
    assert out.shape == (batch, out_features)
    assert jnp.allclose(out, ref_fn(tau), atol=1e-5, rtol=1e-5), "mismatch vs reference"

    # Second check: exercise the tiled/ragged-N grid path with a small tile.
    tau_big = jax.random.normal(k_tau2, (300, in_features), dtype=jnp.float32)
    forward_tiled = jax.jit(make_cosine_activation(w, b, w0, b0, tile_n_max=128))
    out_big = jax.block_until_ready(forward_tiled(tau_big))
    assert out_big.shape == (300, out_features)
    assert jnp.allclose(out_big, ref_fn(tau_big), atol=1e-5, rtol=1e-5), \
        "mismatch vs reference (tiled path)"

    print("KERNEL_OK")
</pallas_src>

<mosaic_0001>
module attributes {stable_mosaic.version = 11 : i64} {
  func.func @_t2v_cos_kernel(%arg0: i32, %arg1: i32, %arg2: memref<8x16xf32, #tpu.memory_space<vmem>>, %arg3: memref<16x32xf32, #tpu.memory_space<vmem>>, %arg4: memref<1x32xf32, #tpu.memory_space<vmem>>, %arg5: memref<8x32xf32, #tpu.memory_space<vmem>>) attributes {dimension_semantics = [#tpu.dimension_semantics<parallel>, #tpu.dimension_semantics<parallel>], iteration_bounds = array<i64: 1, 1>, scalar_prefetch = 0 : i64, scratch_operands = 0 : i64, tpu.core_type = #tpu.core_type<tc>, window_params = [{transform_indices = @transform_0, window_bounds = array<i64: 8, 16>}, {transform_indices = @transform_1, window_bounds = array<i64: 16, 32>}, {transform_indices = @transform_2, window_bounds = array<i64: 1, 32>}, {transform_indices = @transform_3, window_bounds = array<i64: 8, 32>}]} {
    %c0 = arith.constant 0 : index
    %c0_0 = arith.constant 0 : index
    %0 = vector.load %arg2[%c0, %c0_0] : memref<8x16xf32, #tpu.memory_space<vmem>>, vector<8x16xf32>
    %c0_1 = arith.constant 0 : index
    %c0_2 = arith.constant 0 : index
    %1 = vector.load %arg3[%c0_1, %c0_2] : memref<16x32xf32, #tpu.memory_space<vmem>>, vector<16x32xf32>
    %cst = arith.constant dense<0.000000e+00> : vector<8x32xf32>
    %2 = tpu.matmul %0, %1, %cst {dimension_numbers = #tpu.dot_dimension_numbers<[1], [0], [0], [1], [0, 0, 1, 1], [], []>} : vector<8x16xf32>, vector<16x32xf32>, vector<8x32xf32> -> vector<8x32xf32>
    %c0_3 = arith.constant 0 : index
    %c0_4 = arith.constant 0 : index
    %3 = vector.load %arg4[%c0_3, %c0_4] : memref<1x32xf32, #tpu.memory_space<vmem>>, vector<1x32xf32>
    %4 = vector.broadcast %3 : vector<1x32xf32> to vector<8x32xf32>
    %5 = arith.addf %2, %4 : vector<8x32xf32>
    %6 = math.cos %5 : vector<8x32xf32>
    %c0_5 = arith.constant 0 : index
    %c0_6 = arith.constant 0 : index
    %7 = vector.load %arg5[%c0_5, %c0_6] : memref<8x32xf32, #tpu.memory_space<vmem>>, vector<8x32xf32>
    tpu.vector_store %arg5[%c0_5, %c0_6], %6 {strides = array<i32>} : memref<8x32xf32, #tpu.memory_space<vmem>>, vector<8x32xf32>,
    %c0_i32 = arith.constant 0 : i32
    %8 = arith.cmpi eq, %arg1, %c0_i32 : i32
    %9 = arith.extui %8 : i1 to i32
    %c0_i32_7 = arith.constant 0 : i32
    %10 = arith.cmpi ne, %9, %c0_i32_7 : i32
    scf.if %10 {
      %11 = vector.extract_strided_slice %5 {offsets = [0, 31], sizes = [8, 1], strides = [1, 1]} : vector<8x32xf32> to vector<8x1xf32>
      %c0_8 = arith.constant 0 : index
      %c31 = arith.constant 31 : index
      %12 = vector.load %arg5[%c0_8, %c31] : memref<8x32xf32, #tpu.memory_space<vmem>>, vector<8x1xf32>
      tpu.vector_store %arg5[%c0_8, %c31], %11 {strides = array<i32>} : memref<8x32xf32, #tpu.memory_space<vmem>>, vector<8x1xf32>,
    } else {
    }
    return
  }
  func.func @transform_0(%arg0: i32, %arg1: i32) -> (i32, i32) {
    %c0_i32 = arith.constant 0 : i32
    %c0_i32_0 = arith.constant 0 : i32
    return %arg0, %c0_i32 : i32, i32
  }
  func.func @transform_1(%arg0: i32, %arg1: i32) -> (i32, i32) {
    %c0_i32 = arith.constant 0 : i32
    %c0_i32_0 = arith.constant 0 : i32
    return %c0_i32, %arg1 : i32, i32
  }
  func.func @transform_2(%arg0: i32, %arg1: i32) -> (i32, i32) {
    %c0_i32 = arith.constant 0 : i32
    %c0_i32_0 = arith.constant 0 : i32
    return %c0_i32, %arg1 : i32, i32
  }
  func.func @transform_3(%arg0: i32, %arg1: i32) -> (i32, i32) {
    %c0_i32 = arith.constant 0 : i32
    return %arg0, %arg1 : i32, i32
  }
}

</mosaic_0001>

<llo_original>
// kernel: forward.1
$region0: #{forward.1}
  #allocation0 [shape = 'u32[]', space=smem, size = 0x4, offset = 0x4, fixed_abs, tag = 'smem constant byte address 0x4 - core index']
  #allocation1 [shape = 'u32[144,128]{1,0:T(1,128)}', space=vmem, size = 0x12000, scoped, tag = 'internal scratch']
  %s0 = inlined_call_operand.hbm [shape: f32[8,16], index: 0, kind: input, shape index: {}]
  %s1 = inlined_call_operand.hbm [shape: f32[16,32], index: 1, kind: input, shape index: {}]
  %s2 = inlined_call_operand.vmem [shape: f32[1,32], index: 2, kind: input, shape index: {}]
  %s3 = inlined_call_operand.hbm [shape: f32[8,32], index: 3, kind: output, shape index: {}]
  %s4 = sld [smem:[#allocation0]]
  $region34: #{forward.1} parent=0
    _
  %s6 = ssub.s32 1, %s4
  %s7 = scalar_select 0, %s6, %s4
  $region1: #{forward.1} parent=0
    #allocation2 [shape = 'u8[4096]{0}', space=vmem, size = 0x1000, scoped, tag = 'input window, operand 0, single buffered']
    #allocation3 [shape = 's32[1]{0}', space=sflag, size = 0x4, scoped, tag = 'scoped memory for forward.1']
    #allocation4 [shape = 's32[1]{0}', space=sflag, size = 0x4, scoped, tag = 'scoped memory for forward.1']
    #allocation5 [shape = 'u8[8192]{0}', space=vmem, size = 0x2000, scoped, tag = 'input window, operand 1, single buffered']
    #allocation6 [shape = 's32[1]{0}', space=sflag, size = 0x4, scoped, tag = 'scoped memory for forward.1']
    #allocation7 [shape = 'u8[4096]{0}', space=vmem, size = 0x1000, scoped, tag = 'output window, operand 0, single buffered']
    %8 = vsyncpa [#allocation3], 0
    %9 = vsyncpa [#allocation6], 0
    %10 = vsyncpa [#allocation4], 0
    // Predicated region
    $region2: #{forward.1} parent=1 // pred_check
      _
    $region3: #{forward.1} parent=1 // pred_check_branch
      %12 = sbr.rel (0) target = $region5
    $region4: #{forward.1} parent=1 // pred_region
      %s14 = ssub.s32 128, 128
      %15 = vsyncadd [#allocation3], %s14
      %s17 = sshll.u32 [#allocation2], 4
      %s18 = int_to_ptr.vmem [resolvable:$true] %s17
      %20 = dma.hbm_to_vmem [thread:$0]  %s0, 128, %s18, [#allocation3]
    $region5: #{forward.1} parent=1 // pred_fallthru
      _
    // Predicated region
    $region6: #{forward.1} parent=1 // pred_check
      _
    $region7: #{forward.1} parent=1 // pred_check_branch
      %22 = sbr.rel (0) target = $region9
    $region8: #{forward.1} parent=1 // pred_region
      %s24 = ssub.s32 256, 256
      %25 = vsyncadd [#allocation6], %s24
      %s26 = sshll.u32 [#allocation5], 4
      %s27 = int_to_ptr.vmem [resolvable:$true] %s26
      %32 = dma.hbm_to_vmem [thread:$0]  %s1, 256, %s27, [#allocation6], 128, 128, 8
    $region9: #{forward.1} parent=1 // pred_fallthru
      _
    // Predicated region
    $region10: #{forward.1} parent=1 // pred_check
      _
    $region11: #{forward.1} parent=1 // pred_check_branch
      %34 = sbr.rel (0) target = $region13
    $region12: #{forward.1} parent=1 // pred_region
      _
    $region13: #{forward.1} parent=1 // pred_fallthru
      _
    // Predicated region
    $region14: #{forward.1} parent=1 // pred_check
      _
    $region15: #{forward.1} parent=1 // pred_check_branch
      %36 = sbr.rel (0) target = $region17
    $region16: #{forward.1} parent=1 // pred_region
      %37 = dma.done [#allocation3], 128
    $region17: #{forward.1} parent=1 // pred_fallthru
      _
    // Predicated region
    $region18: #{forward.1} parent=1 // pred_check
      _
    $region19: #{forward.1} parent=1 // pred_check_branch
      %39 = sbr.rel (0) target = $region21
    $region20: #{forward.1} parent=1 // pred_region
      %40 = dma.done [#allocation6], 256
    $region21: #{forward.1} parent=1 // pred_fallthru
      _
    %v41 = vld [vmem:[#allocation2] sm:$0xff]
    %v42 = vld [vmem:[#allocation5] sm:$0xff]
    %v43 = vld [vmem:[#allocation5 + $0x8] sm:$0xff]
    %v44 = vld [vmem:[%s2] sm:$0x1]
    %v46 = vlaneseq
    %v47 = vshrl.u32 %v46, 7
    %v48 = vsub.s32 0, %v47
    %v49 = vrot.slane %v44, %v48
    %vm51 = vcmask 130048
    %v53 = vsel %vm51, %v41, 0
    %55 = vmatprep.subr.mxu0 0.0
    %56 = vmatpush1.msra.mxu0 %v42
    %57 = vmatprep.subr.mxu0 0.0
    %58 = vmatpush1.msra.mxu0 %v43
    %59 = vmatprep.subr.mxu0 0.0
    %60 = vmatpush1.msra.mxu0 0.0
    %61 = vmatprep.subr.mxu0 0.0
    %62 = vmatpush1.msra.mxu0 0.0
    %63 = vmatprep.subr.mxu0 0.0
    %64 = vmatpush1.msra.mxu0 0.0
    %65 = vmatprep.subr.mxu0 0.0
    %66 = vmatpush1.msra.mxu0 0.0
    %67 = vmatprep.subr.mxu0 0.0
    %68 = vmatpush1.msra.mxu0 0.0
    %69 = vmatprep.subr.mxu0 0.0
    %70 = vmatpush1.msra.mxu0 0.0
    %71 = vmatprep.subr.mxu0 0.0
    %72 = vmatpush1.msra.mxu0 0.0
    %73 = vmatprep.subr.mxu0 0.0
    %74 = vmatpush1.msra.mxu0 0.0
    %75 = vmatprep.subr.mxu0 0.0
    %76 = vmatpush1.msra.mxu0 0.0
    %77 = vmatprep.subr.mxu0 0.0
    %78 = vmatpush1.msra.mxu0 0.0
    %79 = vmatprep.subr.mxu0 0.0
    %80 = vmatpush1.msra.mxu0 0.0
    %81 = vmatprep.subr.mxu0 0.0
    %82 = vmatpush1.msra.mxu0 0.0
    %83 = vmatprep.subr.mxu0 0.0
    %84 = vmatpush1.msra.mxu0 0.0
    %85 = vmatprep.subr.mxu0 0.0
    %86 = vmatpush1.msra.mxu0 0.0
    %87 = vmatprep.subr.mxu0 0.0
    %88 = vmatpush1.msra.mxu0 0.0
    %89 = vmatprep.subr.mxu0 0.0
    %90 = vmatpush1.msra.mxu0 0.0
    %91 = vmatprep.subr.mxu0 0.0
    %92 = vmatpush1.msra.mxu0 0.0
    %93 = vmatprep.subr.mxu0 0.0
    %94 = vmatpush1.msra.mxu0 0.0
    %95 = vmatprep.subr.mxu0 0.0
    %96 = vmatpush1.msra.mxu0 0.0
    %97 = vmatprep.subr.mxu0 0.0
    %98 = vmatpush1.msra.mxu0 0.0
    %99 = vmatprep.subr.mxu0 0.0
    %100 = vmatpush1.msra.mxu0 0.0
    %101 = vmatprep.subr.mxu0 0.0
    %102 = vmatpush1.msra.mxu0 0.0
    %103 = vmatprep.subr.mxu0 0.0
    %104 = vmatpush1.msra.mxu0 0.0
    %105 = vmatprep.subr.mxu0 0.0
    %106 = vmatpush1.msra.mxu0 0.0
    %107 = vmatprep.subr.mxu0 0.0
    %108 = vmatpush1.msra.mxu0 0.0
    %109 = vmatprep.subr.mxu0 0.0
    %110 = vmatpush1.msra.mxu0 0.0
    %111 = vmatprep.subr.mxu0 0.0
    %112 = vmatpush1.msra.mxu0 0.0
    %113 = vmatprep.subr.mxu0 0.0
    %114 = vmatpush1.msra.mxu0 0.0
    %115 = vmatprep.subr.mxu0 0.0
    %116 = vmatpush1.msra.mxu0 0.0
    %117 = vmatprep.subr.mxu0 0.0
    %118 = vmatpush1.msra.mxu0 0.0
    %119 = vmatprep.mubr.f32.mxu0 0.0
    %120 = vmatmul.mubr.f32.gmra.mrb[0].mxu0 %v53
    %v121 = vpop.f32.mrb[0].mxu0
    %v122 = vadd.f32 %v49, %v121
    %v123 = vpop.f32.mrb[0].mxu0
    %124 = vdwg.mxu0
    %v125 = vand.u32 2147483647, %v122
    %vm126 = vcmp.le.f32.partialorder %v125, 0.7853982
    %vm127 = vcmp.lt.s32.totalorder %v122, 0
    %v128 = vand.u32 %v122, 2139095040
    %v129 = vshrl.u32 %v128, 23
    %v130 = vsub.s32 %v129, 127
    %v131 = vand.u32 2147483647, %v122
    %v132 = vand.u32 %v131, 8388607
    %v133 = vor.u32 %v132, 8388608
    %v134 = vsub.s32 0, %v133
    %v135 = vadd.s32 %v130, 1
    %vm136 = vcmp.gt.s32.totalorder %v135, 0
    %v137 = vsel %vm136, %v135, 0
    %v138 = vshrl.u32 %v137, 5
    %v139 = vand.u32 %v137, 31
    %v140 = vsub.s32 32, %v139
    %v141 = vshrl.u32 683565275, %v140
    %v142 = vshll.u32 683565275, %v139
    %v143 = vshrl.u32 2475754826, %v140
    %v144 = vor.u32 %v142, %v143
    %v145 = vshll.u32 2475754826, %v139
    %v146 = vshrl.u32 2131351028, %v140
    %v147 = vor.u32 %v145, %v146
    %v148 = vshll.u32 2131351028, %v139
    %v149 = vshrl.u32 2102212464, %v140
    %v150 = vor.u32 %v148, %v149
    %v151 = vshll.u32 2102212464, %v139
    %v152 = vshrl.u32 920167782, %v140
    %v153 = vor.u32 %v151, %v152
    %v154 = vshll.u32 920167782, %v139
    %v155 = vshrl.u32 1326507024, %v140
    %v156 = vor.u32 %v154, %v155
    %vm157 = vcmp.lt.s32.totalorder %v138, 1
    %vm158 = vcmp.lt.s32.totalorder %v138, 2
    %vm159 = vcmp.lt.s32.totalorder %v138, 3
    %vm160 = vcmp.lt.s32.totalorder %v138, 4
    %v161 = vsel %vm157, %v141, %v144
    %v162 = vsel %vm160, %v150, 2102212464
    %v163 = vsel %vm159, %v147, %v162
    %v164 = vsel %vm158, %v161, %v163
    %v165 = vsel %vm157, %v144, %v147
    %v166 = vsel %vm160, %v153, 920167782
    %v167 = vsel %vm159, %v150, %v166
    %v168 = vsel %vm158, %v165, %v167
    %v169 = vsel %vm157, %v147, %v150
    %v170 = vsel %vm160, %v156, 1326507024
    %v171 = vsel %vm159, %v153, %v170
    %v172 = vsel %vm158, %v169, %v171
    %v173 = vshll.u32 %v133, 8
    %v174 = vmul.u32.u64.compose %v173, %v172
    %v175 = vextract.low.u32 %v174
    %v176 = vextract.high.u32 %v174
    %v177 = vmul.u32.u64.compose %v173, %v168
    %v178 = vextract.low.u32 %v177
    %v179 = vextract.high.u32 %v177
    %v180 = vmul.u32 %v173, %v164
    %v181 = vadd.s32 %v176, %v178
    %vm182 = vc.u32 %v176, %v178
    %v183 = vadd.s32 %v179, 1
    %v184 = vsel %vm182, %v183, %v179
    %v185 = vadd.s32 %v180, %v184
    %v186 = vadd.s32 %v185, 536870912
    %v187 = vshrl.u32 %v186, 30
    %v188 = vshll.u32 %v187, 30
    %v189 = vsub.s32 %v185, %v188
    %vm190 = vcmp.lt.s32.totalorder %v189, 0
    %v191 = vsub.s32 0, %v189
    %v192 = vsel %vm190, %v191, %v189
    %v193 = vclz %v192
    %v194 = vsub.s32 %v193, 2
    %vm195 = vcmp.gt.s32.totalorder 0, %v194
    %v196 = vsel %vm195, 0, %v194
    %v197 = vsub.s32 32, %v196
    %v198 = vshll.u32 %v189, %v196
    %v199 = vshrl.u32 %v181, %v197
    %v200 = vor.u32 %v198, %v199
    %v201 = vsub.s32 4294967266, %v196
    %v202 = vadd.s32 %v201, 127
    %v203 = vshll.u32 %v202, 23
    %v204 = vor.u32 4788187, %v203
    %v205 = vand.u32 2147483647, %v204
    %v207 = vcvt.s32.f32 %v200
    %v208 = vmul.f32 %v207, %v205
    %v209 = vxor.u32 %v208, 2147483648
    %v210 = vsel %vm127, %v209, %v208
    %v211 = vsub.s32 4, %v187
    %v212 = vsel %vm127, %v211, %v187
    %v213 = vsel %vm126, %v122, %v210
    %v214 = vsel %vm126, 0, %v212
    %v215 = vcosq.f32.pop %v213
    %v216 = vsinq.f32.pop %v213
    %vm217 = vweird.f32 %v122
    %v218 = vand.u32 %v214, 3
    %vm219 = vcmp.lt.s32.totalorder %v218, 2
    %vm220 = vcmp.eq.s32.totalorder %v218, 0
    %v221 = vxor.u32 %v216, 2147483648
    %v222 = vsel %vm220, %v215, %v221
    %vm223 = vcmp.eq.s32.totalorder %v218, 2
    %v224 = vxor.u32 %v215, 2147483648
    %v225 = vsel %vm223, %v224, %v216
    %v226 = vsel %vm219, %v222, %v225
    %v227 = vsel %vm217, nan, %v226
    %vm228 = vcmask 261120
    %229 = vst.msk [vmem:[#allocation7] sm:$0xff] %vm228, %v227
    %p230 = scmp.eq.s32.totalorder 0, 0
    // Predicated region
    $region22: #{forward.1} parent=1 // pred_check
      %p231 = pneg %p230
    $region23: #{forward.1} parent=1 // pred_check_branch
      %233 = sbr.rel (%p231) target = $region25
    $region24: #{forward.1} parent=1 // pred_region
      %vm234 = vcmask 261368
      %235 = vst.msk [vmem:[#allocation7] sm:$0xff] %vm234, %v122
    $region25: #{forward.1} parent=1 // pred_fallthru
      _
    // Predicated region
    $region26: #{forward.1} parent=1 // pred_check
      _
    $region27: #{forward.1} parent=1 // pred_check_branch
      %237 = sbr.rel (0) target = $region29
    $region28: #{forward.1} parent=1 // pred_region
      %s239 = ssub.s32 128, 128
      %240 = vsyncadd [#allocation4], %s239
      %s242 = sshll.u32 [#allocation7], 4
      %s243 = int_to_ptr.vmem [resolvable:$true] %s242
      %245 = dma.vmem_to_hbm [thread:$0]  %s243, 128, %s3, [#allocation4]
    $region29: #{forward.1} parent=1 // pred_fallthru
      _
    // Predicated region
    $region30: #{forward.1} parent=1 // pred_check
      _
    $region31: #{forward.1} parent=1 // pred_check_branch
      %247 = sbr.rel (0) target = $region33
    $region32: #{forward.1} parent=1 // pred_region
      %248 = dma.done [#allocation4], 128
    $region33: #{forward.1} parent=1 // pred_fallthru
      _
    %249 = vsyncpa [#allocation3], 1
    %250 = vsyncpa [#allocation6], 1
    %251 = vsyncpa [#allocation4], 1

</llo_original>
